<compile_context>
chip_gen: v6e
topology: v6e:2x2x1
jax: 0.10.0
libtpu: 0.0.40
codegen_flags: <defaults>
</compile_context>

<pallas_src>
import functools

import jax
import jax.numpy as jnp
from jax.experimental import pallas as pl
from jax.experimental.pallas import tpu as pltpu


def _se_kernel(x_ref, w1t_ref, w2t_ref, o_ref, *, inv_hw):
    # x_ref / o_ref : (Bt, C, HW)  full-extent trailing dims (no wrapper pad;
    #                              Mosaic masks the lane-tail store itself).
    # w1t_ref       : (C, Cr)      first FC weight, pre-transposed in wrapper.
    # w2t_ref       : (Cr, C)      second FC weight, pre-transposed in wrapper.
    x = x_ref[...]                                      # native dtype, loaded once
    # Squeeze: AdaptiveAvgPool2d(1) == lane-reduce * (1/HW).  Only the (Bt, C)
    # accumulator is f32 -- the full tile is never held as an f32 copy.
    y = jnp.sum(x, axis=-1, dtype=jnp.float32) * inv_hw              # (Bt, C)
    # Excite: Linear(C->Cr) -> ReLU -> Linear(Cr->C) -> Sigmoid.
    # Weights arrive pre-transposed: no in-kernel XLU transpose work.
    h = jnp.dot(y, w1t_ref[...], preferred_element_type=jnp.float32)   # (Bt, Cr)
    h = jnp.maximum(h, 0.0)
    s = jnp.dot(h, w2t_ref[...], preferred_element_type=jnp.float32)   # (Bt, C)
    s = jax.nn.sigmoid(s).astype(o_ref.dtype)
    # Scale: per-channel broadcast over the spatial (lane) axis, native dtype.
    o_ref[...] = (x * s[:, :, None]).astype(o_ref.dtype)


def se_layer(x, w1, w2):
    """x: (B, C, H, W); w1: (C//r, C); w2: (C, C//r).  Returns (B, C, H, W)."""
    B, C, H, W = x.shape
    Cr = w1.shape[0]
    HW = H * W

    # Trailing-dim merge of a contiguous array is layout-free (no HBM copy).
    x_flat = x.reshape(B, C, HW)

    # Pre-transpose weights once in the wrapper (hoisted out of the kernel).
    w1t = jnp.transpose(w1)                # (C, Cr)
    w2t = jnp.transpose(w2)                # (Cr, C)

    # Generation-aware VMEM ceiling: ~85% of physical per-core VMEM
    # (128 MiB on v5e/v6e, 64 MiB on v7x) -> big slabs on v5e/v6e while
    # leaving headroom for compiler-internal scratch on v7x.
    try:
        vmem_cap = int(pltpu.get_tpu_info().vmem_capacity_bytes)
    except Exception:  # unknown part / interpret mode: assume smallest (v7x).
        vmem_cap = 64 << 20
    vmem_ceiling = int(vmem_cap * 0.85)

    x_itemsize = jnp.dtype(x.dtype).itemsize
    w_itemsize = jnp.dtype(w1.dtype).itemsize
    per_b_bytes = C * HW * x_itemsize
    weight_bytes = 2 * (C * Cr + Cr * C) * w_itemsize   # double-buffered weights
    slack = 1 << 20

    # Batch-pack so each grid step moves >= ~512 KiB, capped so the
    # double-buffered in+out slabs fit under the VMEM ceiling, and rounded
    # down to a divisor of B (no partial trailing block).
    target_step_bytes = 512 << 10
    bt = max(1, min(B, target_step_bytes // max(per_b_bytes, 1)))
    max_bt = max(1, (vmem_ceiling - weight_bytes - slack) // max(4 * per_b_bytes, 1))
    bt = max(1, min(bt, max_bt))
    while B % bt:
        bt -= 1
    # TODO(synk): if a single batch element (4 * per_b_bytes) exceeds the VMEM
    # ceiling (very large C*HW; hit earliest on v7x's 64 MiB), split into a
    # pooled-sum pass + scale pass tiled over HW -- that also gives v7x's two
    # TensorCores a second parallel axis when B is small.

    num_steps = B // bt
    vmem_needed = 4 * bt * per_b_bytes + weight_bytes + slack
    vmem_limit = int(min(max(vmem_needed, 8 << 20), vmem_ceiling))

    kernel = functools.partial(_se_kernel, inv_hw=float(1.0 / HW))

    out_flat = pl.pallas_call(
        kernel,
        out_shape=jax.ShapeDtypeStruct((B, C, HW), x.dtype),
        grid_spec=pltpu.PrefetchScalarGridSpec(
            num_scalar_prefetch=0,
            grid=(num_steps,),
            in_specs=[
                pl.BlockSpec((bt, C, HW), lambda b: (b, 0, 0)),
                # Weight blocks are constant-index; small, so default
                # double-buffering overhead is negligible here.
                pl.BlockSpec((C, Cr), lambda b: (0, 0)),
                pl.BlockSpec((Cr, C), lambda b: (0, 0)),
            ],
            out_specs=pl.BlockSpec((bt, C, HW), lambda b: (b, 0, 0)),
        ),
        compiler_params=pltpu.CompilerParams(
            dimension_semantics=("parallel",),
            vmem_limit_bytes=vmem_limit,
        ),
    )(x_flat, w1t, w2t)

    return out_flat.reshape(B, C, H, W)


def se_layer_ref(x, w1, w2):
    # Pure-JAX reference of the PyTorch forward.
    y = jnp.mean(x, axis=(2, 3))                 # (B, C)
    h = jnp.maximum(y @ w1.T, 0.0)               # (B, C//r)
    s = jax.nn.sigmoid(h @ w2.T)                 # (B, C)
    return x * s[:, :, None, None]


if __name__ == "__main__":
    B, C, H, W = 2, 32, 14, 14       # HW=196 exercises the non-128-multiple tail
    reduction = 16
    Cr = C // reduction              # 2

    key = jax.random.PRNGKey(0)
    kx, k1, k2 = jax.random.split(key, 3)

    x = jax.random.normal(kx, (B, C, H, W), dtype=jnp.float32)
    # Same shapes as nn.Linear(C, C//r, bias=False) / nn.Linear(C//r, C, bias=False).
    w1 = jax.random.normal(k1, (Cr, C), dtype=jnp.float32) * (1.0 / jnp.sqrt(C))
    w2 = jax.random.normal(k2, (C, Cr), dtype=jnp.float32) * (1.0 / jnp.sqrt(Cr))

    out = se_layer(x, w1, w2)
    jax.block_until_ready(out)

    ref = se_layer_ref(x, w1, w2)
    assert out.shape == (B, C, H, W)
    assert jnp.allclose(out, ref, atol=1e-5, rtol=1e-5)

    print("KERNEL_OK")
</pallas_src>

<mosaic_0001>
module attributes {stable_mosaic.version = 11 : i64} {
  func.func @_se_kernel(%arg0: i32, %arg1: memref<2x32x196xf32, #tpu.memory_space<vmem>>, %arg2: memref<32x2xf32, #tpu.memory_space<vmem>>, %arg3: memref<2x32xf32, #tpu.memory_space<vmem>>, %arg4: memref<2x32x196xf32, #tpu.memory_space<vmem>>) attributes {dimension_semantics = [#tpu.dimension_semantics<parallel>], iteration_bounds = array<i64: 1>, scalar_prefetch = 0 : i64, scratch_operands = 0 : i64, tpu.core_type = #tpu.core_type<tc>, window_params = [{transform_indices = @transform_0, window_bounds = array<i64: 2, 32, 196>}, {pipeline_mode = #tpu.pipeline_mode<synchronous>, transform_indices = @transform_1, window_bounds = array<i64: 32, 2>}, {pipeline_mode = #tpu.pipeline_mode<synchronous>, transform_indices = @transform_2, window_bounds = array<i64: 2, 32>}, {transform_indices = @transform_3, window_bounds = array<i64: 2, 32, 196>}]} {
    %c0 = arith.constant 0 : index
    %c0_0 = arith.constant 0 : index
    %c0_1 = arith.constant 0 : index
    %0 = vector.load %arg1[%c0, %c0_0, %c0_1] : memref<2x32x196xf32, #tpu.memory_space<vmem>>, vector<2x32x196xf32>
    %cst = arith.constant dense<0.000000e+00> : vector<2x32xf32>
    %1 = vector.multi_reduction <add>, %0, %cst [2] : vector<2x32x196xf32> to vector<2x32xf32>
    %cst_2 = arith.constant 0.00510204071 : f32
    %2 = vector.broadcast %cst_2 : f32 to vector<2x32xf32>
    %3 = arith.mulf %1, %2 : vector<2x32xf32>
    %c0_3 = arith.constant 0 : index
    %c0_4 = arith.constant 0 : index
    %4 = vector.load %arg2[%c0_3, %c0_4] : memref<32x2xf32, #tpu.memory_space<vmem>>, vector<32x2xf32>
    %cst_5 = arith.constant dense<0.000000e+00> : vector<2x2xf32>
    %5 = tpu.matmul %3, %4, %cst_5 {dimension_numbers = #tpu.dot_dimension_numbers<[1], [0], [0], [1], [0, 0, 1, 1], [], []>} : vector<2x32xf32>, vector<32x2xf32>, vector<2x2xf32> -> vector<2x2xf32>
    %cst_6 = arith.constant 0.000000e+00 : f32
    %6 = vector.broadcast %cst_6 : f32 to vector<2x2xf32>
    %7 = arith.maximumf %5, %6 : vector<2x2xf32>
    %c0_7 = arith.constant 0 : index
    %c0_8 = arith.constant 0 : index
    %8 = vector.load %arg3[%c0_7, %c0_8] : memref<2x32xf32, #tpu.memory_space<vmem>>, vector<2x32xf32>
    %cst_9 = arith.constant dense<0.000000e+00> : vector<2x32xf32>
    %9 = tpu.matmul %7, %8, %cst_9 {dimension_numbers = #tpu.dot_dimension_numbers<[1], [0], [0], [1], [0, 0, 1, 1], [], []>} : vector<2x2xf32>, vector<2x32xf32>, vector<2x32xf32> -> vector<2x32xf32>
    %10 = arith.negf %9 : vector<2x32xf32>
    %11 = math.exp %10 : vector<2x32xf32>
    %cst_10 = arith.constant 1.000000e+00 : f32
    %12 = vector.broadcast %cst_10 : f32 to vector<2x32xf32>
    %13 = arith.addf %12, %11 : vector<2x32xf32>
    %14 = arith.divf %12, %13 : vector<2x32xf32>
    %15 = vector.shape_cast %14 : vector<2x32xf32> to vector<2x32x1xf32>
    %16 = vector.broadcast %15 : vector<2x32x1xf32> to vector<2x32x196xf32>
    %17 = arith.mulf %0, %16 : vector<2x32x196xf32>
    %c0_11 = arith.constant 0 : index
    %c0_12 = arith.constant 0 : index
    %c0_13 = arith.constant 0 : index
    %18 = vector.load %arg4[%c0_11, %c0_12, %c0_13] : memref<2x32x196xf32, #tpu.memory_space<vmem>>, vector<2x32x196xf32>
    tpu.vector_store %arg4[%c0_11, %c0_12, %c0_13], %17 {strides = array<i32>} : memref<2x32x196xf32, #tpu.memory_space<vmem>>, vector<2x32x196xf32>,
    return
  }
  func.func @transform_0(%arg0: i32) -> (i32, i32, i32) {
    %c0_i32 = arith.constant 0 : i32
    %c0_i32_0 = arith.constant 0 : i32
    %c0_i32_1 = arith.constant 0 : i32
    return %arg0, %c0_i32, %c0_i32_0 : i32, i32, i32
  }
  func.func @transform_1(%arg0: i32) -> (i32, i32) {
    %c0_i32 = arith.constant 0 : i32
    %c0_i32_0 = arith.constant 0 : i32
    %c0_i32_1 = arith.constant 0 : i32
    return %c0_i32, %c0_i32_0 : i32, i32
  }
  func.func @transform_2(%arg0: i32) -> (i32, i32) {
    %c0_i32 = arith.constant 0 : i32
    %c0_i32_0 = arith.constant 0 : i32
    %c0_i32_1 = arith.constant 0 : i32
    return %c0_i32, %c0_i32_0 : i32, i32
  }
  func.func @transform_3(%arg0: i32) -> (i32, i32, i32) {
    %c0_i32 = arith.constant 0 : i32
    %c0_i32_0 = arith.constant 0 : i32
    %c0_i32_1 = arith.constant 0 : i32
    return %arg0, %c0_i32, %c0_i32_0 : i32, i32, i32
  }
}

</mosaic_0001>

<llo_original>
// kernel: tpu_custom_call.1
$region0: #{tpu_custom_call.1}
  #allocation0 [shape = 'u32[]', space=smem, size = 0x4, offset = 0x4, fixed_abs, tag = 'smem constant byte address 0x4 - core index']
  #allocation1 [shape = 'u32[144,128]{1,0:T(1,128)}', space=vmem, size = 0x12000, scoped, tag = 'internal scratch']
  %s0 = inlined_call_operand.hbm [shape: f32[2,32,196], index: 0, kind: input, shape index: {}]
  %s1 = inlined_call_operand.vmem [shape: f32[32,2], index: 1, kind: input, shape index: {}]
  %s2 = inlined_call_operand.vmem [shape: f32[2,32], index: 2, kind: input, shape index: {}]
  %s3 = inlined_call_operand.hbm [shape: f32[2,32,196], index: 3, kind: output, shape index: {}]
  %s4 = sld [smem:[#allocation0]]
  $region26: #{tpu_custom_call.1} parent=0
    _
  %s6 = ssub.s32 1, %s4
  %s7 = scalar_select 0, %s6, %s4
  $region1: #{tpu_custom_call.1} parent=0
    #allocation2 [shape = 'u8[65536]{0}', space=vmem, size = 0x10000, scoped, tag = 'input window, operand 0, single buffered']
    #allocation3 [shape = 's32[1]{0}', space=sflag, size = 0x4, scoped, tag = 'scoped memory for tpu_custom_call.1']
    #allocation4 [shape = 's32[1]{0}', space=sflag, size = 0x4, scoped, tag = 'scoped memory for tpu_custom_call.1']
    #allocation5 [shape = 'u8[65536]{0}', space=vmem, size = 0x10000, scoped, tag = 'output window, operand 0, single buffered']
    %8 = vsyncpa [#allocation3], 0
    %9 = vsyncpa [#allocation4], 0
    // Predicated region
    $region2: #{tpu_custom_call.1} parent=1 // pred_check
      _
    $region3: #{tpu_custom_call.1} parent=1 // pred_check_branch
      %11 = sbr.rel (0) target = $region5
    $region4: #{tpu_custom_call.1} parent=1 // pred_region
      %s13 = ssub.s32 2048, 2048
      %14 = vsyncadd [#allocation3], %s13
      %s15 = sshll.u32 [#allocation2], 4
      %s16 = int_to_ptr.vmem [resolvable:$true] %s15
      %21 = dma.hbm_to_vmem [thread:$0]  %s0, 2048, %s16, [#allocation3], 256, 256, 16
    $region5: #{tpu_custom_call.1} parent=1 // pred_fallthru
      _
    // Predicated region
    $region6: #{tpu_custom_call.1} parent=1 // pred_check
      _
    $region7: #{tpu_custom_call.1} parent=1 // pred_check_branch
      %23 = sbr.rel (0) target = $region9
    $region8: #{tpu_custom_call.1} parent=1 // pred_region
      _
    $region9: #{tpu_custom_call.1} parent=1 // pred_fallthru
      _
    // Predicated region
    $region10: #{tpu_custom_call.1} parent=1 // pred_check
      _
    $region11: #{tpu_custom_call.1} parent=1 // pred_check_branch
      %25 = sbr.rel (0) target = $region13
    $region12: #{tpu_custom_call.1} parent=1 // pred_region
      _
    $region13: #{tpu_custom_call.1} parent=1 // pred_fallthru
      _
    // Predicated region
    $region14: #{tpu_custom_call.1} parent=1 // pred_check
      _
    $region15: #{tpu_custom_call.1} parent=1 // pred_check_branch
      %27 = sbr.rel (0) target = $region17
    $region16: #{tpu_custom_call.1} parent=1 // pred_region
      %28 = dma.done [#allocation3], 2048
    $region17: #{tpu_custom_call.1} parent=1 // pred_fallthru
      _
    %v29 = vld [vmem:[#allocation2] sm:$0xff]
    %v30 = vld [vmem:[#allocation2 + $0x8] sm:$0xff]
    %v31 = vld [vmem:[#allocation2 + $0x10] sm:$0xff]
    %v32 = vld [vmem:[#allocation2 + $0x18] sm:$0xff]
    %v33 = vld [vmem:[#allocation2 + $0x20] sm:$0xff]
    %v34 = vld [vmem:[#allocation2 + $0x28] sm:$0xff]
    %v35 = vld [vmem:[#allocation2 + $0x30] sm:$0xff]
    %v36 = vld [vmem:[#allocation2 + $0x38] sm:$0xff]
    %v37 = vld [vmem:[#allocation2 + $0x40] sm:$0xff]
    %v38 = vld [vmem:[#allocation2 + $0x48] sm:$0xff]
    %v39 = vld [vmem:[#allocation2 + $0x50] sm:$0xff]
    %v40 = vld [vmem:[#allocation2 + $0x58] sm:$0xff]
    %v41 = vld [vmem:[#allocation2 + $0x60] sm:$0xff]
    %v42 = vld [vmem:[#allocation2 + $0x68] sm:$0xff]
    %v43 = vld [vmem:[#allocation2 + $0x70] sm:$0xff]
    %v44 = vld [vmem:[#allocation2 + $0x78] sm:$0xff]
    %vm45 = vcmask 556032
    %v46 = vsel %vm45, %v30, 0.0
    %v47 = vadd.f32 %v29, %v46
    %48 = vadd.xlane.f32.xlu0 %v47
    %v49 = vpop.xlane.xlu0 %48
    %v50 = vsel %vm45, %v32, 0.0
    %v51 = vadd.f32 %v31, %v50
    %52 = vadd.xlane.f32.xlu0 %v51
    %v53 = vpop.xlane.xlu0 %52
    %v54 = vsel %vm45, %v34, 0.0
    %v55 = vadd.f32 %v33, %v54
    %56 = vadd.xlane.f32.xlu0 %v55
    %v57 = vpop.xlane.xlu0 %56
    %v58 = vsel %vm45, %v36, 0.0
    %v59 = vadd.f32 %v35, %v58
    %60 = vadd.xlane.f32.xlu0 %v59
    %v61 = vpop.xlane.xlu0 %60
    %v62 = vsel %vm45, %v38, 0.0
    %v63 = vadd.f32 %v37, %v62
    %64 = vadd.xlane.f32.xlu0 %v63
    %v65 = vpop.xlane.xlu0 %64
    %v66 = vsel %vm45, %v40, 0.0
    %v67 = vadd.f32 %v39, %v66
    %68 = vadd.xlane.f32.xlu0 %v67
    %v69 = vpop.xlane.xlu0 %68
    %v70 = vsel %vm45, %v42, 0.0
    %v71 = vadd.f32 %v41, %v70
    %72 = vadd.xlane.f32.xlu0 %v71
    %v73 = vpop.xlane.xlu0 %72
    %v74 = vsel %vm45, %v44, 0.0
    %v75 = vadd.f32 %v43, %v74
    %76 = vadd.xlane.f32.xlu0 %v75
    %v77 = vpop.xlane.xlu0 %76
    %v78 = vmul.f32 %v49, 0.0051020407
    %v79 = vmul.f32 %v53, 0.0051020407
    %v80 = vmul.f32 %v57, 0.0051020407
    %v81 = vmul.f32 %v61, 0.0051020407
    %v82 = vmul.f32 %v65, 0.0051020407
    %v83 = vmul.f32 %v69, 0.0051020407
    %v84 = vmul.f32 %v73, 0.0051020407
    %v85 = vmul.f32 %v77, 0.0051020407
    %v86 = vld [vmem:[%s1] sm:$0xff]
    %v87 = vld [vmem:[%s1 + $0x8] sm:$0xff]
    %v88 = vld [vmem:[%s1 + $0x10] sm:$0xff]
    %v89 = vld [vmem:[%s1 + $0x18] sm:$0xff]
    %v98 = vlaneseq
    %v99 = vand.u32 %v98, 127
    %v100 = vlaneseq
    %v101 = vshrl.u32 %v100, 7
    %v102 = vsub.s32 %v99, %v101
    %v103 = vrot.slane %v78, %v102
    %v104 = vadd.s32 %v99, 4294967288
    %v105 = vlaneseq
    %v106 = vshrl.u32 %v105, 7
    %v107 = vsub.s32 %v104, %v106
    %v108 = vrot.slane %v79, %v107
    %vm109 = vcmask 130112
    %v110 = vsel %vm109, %v108, %v103
    %v111 = vadd.s32 %v99, 4294967280
    %v112 = vlaneseq
    %v113 = vshrl.u32 %v112, 7
    %v114 = vsub.s32 %v111, %v113
    %v115 = vrot.slane %v80, %v114
    %vm116 = vcmask 195712
    %v117 = vsel %vm116, %v115, %v110
    %v118 = vadd.s32 %v99, 4294967272
    %v119 = vlaneseq
    %v120 = vshrl.u32 %v119, 7
    %v121 = vsub.s32 %v118, %v120
    %v122 = vrot.slane %v81, %v121
    %vm123 = vcmask 261312
    %v124 = vsel %vm123, %v122, %v117
    %v125 = vlaneseq
    %v126 = vshrl.u32 %v125, 7
    %v127 = vsub.s32 %v99, %v126
    %v128 = vrot.slane %v82, %v127
    %v129 = vlaneseq
    %v130 = vshrl.u32 %v129, 7
    %v131 = vsub.s32 %v104, %v130
    %v132 = vrot.slane %v83, %v131
    %v133 = vsel %vm109, %v132, %v128
    %v134 = vlaneseq
    %v135 = vshrl.u32 %v134, 7
    %v136 = vsub.s32 %v111, %v135
    %v137 = vrot.slane %v84, %v136
    %v138 = vsel %vm116, %v137, %v133
    %v139 = vlaneseq
    %v140 = vshrl.u32 %v139, 7
    %v141 = vsub.s32 %v118, %v140
    %v142 = vrot.slane %v85, %v141
    %v143 = vsel %vm123, %v142, %v138
    %vm144 = vcmask 1041409
    %v145 = vsel %vm144, %v143, %v124
    %vm146 = vcmask 261120
    %v147 = vsel %vm146, %v145, 0
    %149 = vmatprep.subr.mxu0 0.0
    %150 = vmatpush1.msra.mxu0 0.0
    %151 = vmatprep.subr.mxu0 0.0
    %152 = vmatpush1.msra.mxu0 0.0
    %153 = vmatprep.subr.mxu0 0.0
    %154 = vmatpush1.msra.mxu0 0.0
    %155 = vmatprep.subr.mxu0 0.0
    %156 = vmatpush1.msra.mxu0 0.0
    %157 = vmatprep.subr.mxu0 0.0
    %158 = vmatpush1.msra.mxu0 0.0
    %159 = vmatprep.subr.mxu0 0.0
    %160 = vmatpush1.msra.mxu0 0.0
    %161 = vmatprep.subr.mxu0 0.0
    %162 = vmatpush1.msra.mxu0 0.0
    %163 = vmatprep.subr.mxu0 0.0
    %164 = vmatpush1.msra.mxu0 0.0
    %165 = vmatprep.subr.mxu0 0.0
    %166 = vmatpush1.msra.mxu0 0.0
    %167 = vmatprep.subr.mxu0 0.0
    %168 = vmatpush1.msra.mxu0 0.0
    %169 = vmatprep.subr.mxu0 0.0
    %170 = vmatpush1.msra.mxu0 0.0
    %171 = vmatprep.subr.mxu0 0.0
    %172 = vmatpush1.msra.mxu0 0.0
    %173 = vmatprep.subr.mxu0 0.0
    %174 = vmatpush1.msra.mxu0 %v89
    %175 = vmatprep.subr.mxu0 0.0
    %176 = vmatpush1.msra.mxu0 %v88
    %177 = vmatprep.subr.mxu0 0.0
    %178 = vmatpush1.msra.mxu0 %v87
    %179 = vmatprep.subr.mxu0 0.0
    %180 = vmatpush1.msra.mxu0 %v86
    %181 = vmatprep.subr.mxu0 0.0
    %182 = vmatpush2.msra.mxu0 0.0
    %183 = vmatprep.subr.mxu0 0.0
    %184 = vmatpush2.msra.mxu0 0.0
    %185 = vmatprep.subr.mxu0 0.0
    %186 = vmatpush2.msra.mxu0 0.0
    %187 = vmatprep.subr.mxu0 0.0
    %188 = vmatpush2.msra.mxu0 0.0
    %189 = vmatprep.subr.mxu0 0.0
    %190 = vmatpush2.msra.mxu0 0.0
    %191 = vmatprep.subr.mxu0 0.0
    %192 = vmatpush2.msra.mxu0 0.0
    %193 = vmatprep.subr.mxu0 0.0
    %194 = vmatpush2.msra.mxu0 0.0
    %195 = vmatprep.subr.mxu0 0.0
    %196 = vmatpush2.msra.mxu0 0.0
    %197 = vmatprep.subr.mxu0 0.0
    %198 = vmatpush2.msra.mxu0 0.0
    %199 = vmatprep.subr.mxu0 0.0
    %200 = vmatpush2.msra.mxu0 0.0
    %201 = vmatprep.subr.mxu0 0.0
    %202 = vmatpush2.msra.mxu0 0.0
    %203 = vmatprep.subr.mxu0 0.0
    %204 = vmatpush2.msra.mxu0 0.0
    %205 = vmatprep.subr.mxu0 0.0
    %206 = vmatpush2.msra.mxu0 0.0
    %207 = vmatprep.subr.mxu0 0.0
    %208 = vmatpush2.msra.mxu0 0.0
    %209 = vmatprep.subr.mxu0 0.0
    %210 = vmatpush2.msra.mxu0 0.0
    %211 = vmatprep.subr.mxu0 0.0
    %212 = vmatpush2.msra.mxu0 0.0
    %213 = vmatprep.mubr.f32.mxu0 0.0
    %214 = vmatmul.mubr.f32.gmra.mxu0 %v147
    %v215 = vpop.f32.mrf.mxu0
    %v216 = vadd.f32 0.0, %v215
    %v217 = vpop.f32.mrf.mxu0
    %218 = vdwg.mxu0
    %v219 = vmax.f32 %v216, 0.0
    %v220 = vld [vmem:[%s2] sm:$0x3]
    %vm221 = vcmask 15360
    %v223 = vsel %vm221, %v219, 0
    %vm225 = vcmask 1041408
    %v227 = vsel %vm225, %v220, 0
    %229 = vmatprep.subr.mxu0 0.0
    %230 = vmatpush1.msra.mxu0 0.0
    %231 = vmatprep.subr.mxu0 0.0
    %232 = vmatpush1.msra.mxu0 0.0
    %233 = vmatprep.subr.mxu0 0.0
    %234 = vmatpush1.msra.mxu0 0.0
    %235 = vmatprep.subr.mxu0 0.0
    %236 = vmatpush1.msra.mxu0 0.0
    %237 = vmatprep.subr.mxu0 0.0
    %238 = vmatpush1.msra.mxu0 0.0
    %239 = vmatprep.subr.mxu0 0.0
    %240 = vmatpush1.msra.mxu0 0.0
    %241 = vmatprep.subr.mxu0 0.0
    %242 = vmatpush1.msra.mxu0 0.0
    %243 = vmatprep.subr.mxu0 0.0
    %244 = vmatpush1.msra.mxu0 0.0
    %245 = vmatprep.subr.mxu0 0.0
    %246 = vmatpush1.msra.mxu0 0.0
    %247 = vmatprep.subr.mxu0 0.0
    %248 = vmatpush1.msra.mxu0 0.0
    %249 = vmatprep.subr.mxu0 0.0
    %250 = vmatpush1.msra.mxu0 0.0
    %251 = vmatprep.subr.mxu0 0.0
    %252 = vmatpush1.msra.mxu0 0.0
    %253 = vmatprep.subr.mxu0 0.0
    %254 = vmatpush1.msra.mxu0 0.0
    %255 = vmatprep.subr.mxu0 0.0
    %256 = vmatpush1.msra.mxu0 0.0
    %257 = vmatprep.subr.mxu0 0.0
    %258 = vmatpush1.msra.mxu0 0.0
    %259 = vmatprep.subr.mxu0 0.0
    %260 = vmatpush1.msra.mxu0 %v227
    %261 = vmatprep.subr.mxu0 0.0
    %262 = vmatpush2.msra.mxu0 0.0
    %263 = vmatprep.subr.mxu0 0.0
    %264 = vmatpush2.msra.mxu0 0.0
    %265 = vmatprep.subr.mxu0 0.0
    %266 = vmatpush2.msra.mxu0 0.0
    %267 = vmatprep.subr.mxu0 0.0
    %268 = vmatpush2.msra.mxu0 0.0
    %269 = vmatprep.subr.mxu0 0.0
    %270 = vmatpush2.msra.mxu0 0.0
    %271 = vmatprep.subr.mxu0 0.0
    %272 = vmatpush2.msra.mxu0 0.0
    %273 = vmatprep.subr.mxu0 0.0
    %274 = vmatpush2.msra.mxu0 0.0
    %275 = vmatprep.subr.mxu0 0.0
    %276 = vmatpush2.msra.mxu0 0.0
    %277 = vmatprep.subr.mxu0 0.0
    %278 = vmatpush2.msra.mxu0 0.0
    %279 = vmatprep.subr.mxu0 0.0
    %280 = vmatpush2.msra.mxu0 0.0
    %281 = vmatprep.subr.mxu0 0.0
    %282 = vmatpush2.msra.mxu0 0.0
    %283 = vmatprep.subr.mxu0 0.0
    %284 = vmatpush2.msra.mxu0 0.0
    %285 = vmatprep.subr.mxu0 0.0
    %286 = vmatpush2.msra.mxu0 0.0
    %287 = vmatprep.subr.mxu0 0.0
    %288 = vmatpush2.msra.mxu0 0.0
    %289 = vmatprep.subr.mxu0 0.0
    %290 = vmatpush2.msra.mxu0 0.0
    %291 = vmatprep.subr.mxu0 0.0
    %292 = vmatpush2.msra.mxu0 0.0
    %293 = vmatprep.mubr.f32.mxu0 0.0
    %294 = vmatmul.mubr.f32.gmra.mxu0 %v223
    %v295 = vpop.f32.mrf.mxu0
    %v296 = vadd.f32 0.0, %v295
    %v297 = vpop.f32.mrf.mxu0
    %298 = vdwg.mxu0
    %v299 = vxor.u32 %v296, 2147483648
    %v300 = vmul.f32 %v299, 1.442695
    %v301 = vpow.pop %v300
    %v302 = vadd.f32 %v301, 1.0
    %v303 = vrcp.pop %v302
    %v304 = vmul.f32 1.0, %v303
    %v305 = vlaneseq
    %v306 = vshrl.u32 %v305, 7
    %v307 = vsub.s32 0, %v306
    %v308 = vrot.slane %v304, %v307
    %310 = vbcast.lane.b32.xlu0 %v308, 256
    %v311 = vpop.permute.xlu0 %310
    %s313 = sor.u32 256, 8
    %314 = vbcast.lane.b32.xlu0 %v308, %s313
    %v315 = vpop.permute.xlu0 %314
    %s317 = sor.u32 256, 16
    %318 = vbcast.lane.b32.xlu0 %v308, %s317
    %v319 = vpop.permute.xlu0 %318
    %s321 = sor.u32 256, 24
    %322 = vbcast.lane.b32.xlu0 %v308, %s321
    %v323 = vpop.permute.xlu0 %322
    %v324 = vlaneseq
    %v325 = vshrl.u32 %v324, 7
    %v326 = vsub.s32 1, %v325
    %v327 = vrot.slane %v304, %v326
    %329 = vbcast.lane.b32.xlu0 %v327, 256
    %v330 = vpop.permute.xlu0 %329
    %s332 = sor.u32 256, 8
    %333 = vbcast.lane.b32.xlu0 %v327, %s332
    %v334 = vpop.permute.xlu0 %333
    %s336 = sor.u32 256, 16
    %337 = vbcast.lane.b32.xlu0 %v327, %s336
    %v338 = vpop.permute.xlu0 %337
    %s340 = sor.u32 256, 24
    %341 = vbcast.lane.b32.xlu0 %v327, %s340
    %v342 = vpop.permute.xlu0 %341
    %v343 = vmul.f32 %v29, %v311
    %v344 = vmul.f32 %v30, %v311
    %v345 = vmul.f32 %v31, %v315
    %v346 = vmul.f32 %v32, %v315
    %v347 = vmul.f32 %v33, %v319
    %v348 = vmul.f32 %v34, %v319
    %v349 = vmul.f32 %v35, %v323
    %v350 = vmul.f32 %v36, %v323
    %v351 = vmul.f32 %v37, %v330
    %v352 = vmul.f32 %v38, %v330
    %v353 = vmul.f32 %v39, %v334
    %v354 = vmul.f32 %v40, %v334
    %v355 = vmul.f32 %v41, %v338
    %v356 = vmul.f32 %v42, %v338
    %v357 = vmul.f32 %v43, %v342
    %v358 = vmul.f32 %v44, %v342
    %359 = vst [vmem:[#allocation5] sm:$0xff] %v343
    %360 = vst.msk [vmem:[#allocation5 + $0x8] sm:$0xff] %vm45, %v344
    %361 = vst [vmem:[#allocation5 + $0x10] sm:$0xff] %v345
    %362 = vst.msk [vmem:[#allocation5 + $0x18] sm:$0xff] %vm45, %v346
    %363 = vst [vmem:[#allocation5 + $0x20] sm:$0xff] %v347
    %364 = vst.msk [vmem:[#allocation5 + $0x28] sm:$0xff] %vm45, %v348
    %365 = vst [vmem:[#allocation5 + $0x30] sm:$0xff] %v349
    %366 = vst.msk [vmem:[#allocation5 + $0x38] sm:$0xff] %vm45, %v350
    %367 = vst [vmem:[#allocation5 + $0x40] sm:$0xff] %v351
    %368 = vst.msk [vmem:[#allocation5 + $0x48] sm:$0xff] %vm45, %v352
    %369 = vst [vmem:[#allocation5 + $0x50] sm:$0xff] %v353
    %370 = vst.msk [vmem:[#allocation5 + $0x58] sm:$0xff] %vm45, %v354
    %371 = vst [vmem:[#allocation5 + $0x60] sm:$0xff] %v355
    %372 = vst.msk [vmem:[#allocation5 + $0x68] sm:$0xff] %vm45, %v356
    %373 = vst [vmem:[#allocation5 + $0x70] sm:$0xff] %v357
    %374 = vst.msk [vmem:[#allocation5 + $0x78] sm:$0xff] %vm45, %v358
    // Predicated region
    $region18: #{tpu_custom_call.1} parent=1 // pred_check
      _
    $region19: #{tpu_custom_call.1} parent=1 // pred_check_branch
      %376 = sbr.rel (0) target = $region21
    $region20: #{tpu_custom_call.1} parent=1 // pred_region
      %s378 = ssub.s32 2048, 2048
      %379 = vsyncadd [#allocation4], %s378
      %s380 = sshll.u32 [#allocation5], 4
      %s381 = int_to_ptr.vmem [resolvable:$true] %s380
      %386 = dma.vmem_to_hbm [thread:$0]  %s381, 2048, %s3, [#allocation4], 256, 256, 16
    $region21: #{tpu_custom_call.1} parent=1 // pred_fallthru
      _
    // Predicated region
    $region22: #{tpu_custom_call.1} parent=1 // pred_check
      _
    $region23: #{tpu_custom_call.1} parent=1 // pred_check_branch
      %388 = sbr.rel (0) target = $region25
    $region24: #{tpu_custom_call.1} parent=1 // pred_region
      %389 = dma.done [#allocation4], 2048
    $region25: #{tpu_custom_call.1} parent=1 // pred_fallthru
      _
    %390 = vsyncpa [#allocation3], 1
    %391 = vsyncpa [#allocation4], 1

</llo_original>
